<compile_context>
chip_gen: v6e
topology: v6e:2x2x1
jax: 0.10.0
libtpu: 0.0.40
codegen_flags: <defaults>
</compile_context>

<pallas_src>
import functools
import math

import jax
import jax.numpy as jnp
from jax.experimental import pallas as pl
from jax.experimental.pallas import tpu as pltpu


def make_positional_encoding(d_model: int, max_seq_length: int = 5000,
                             dtype=jnp.float32) -> jnp.ndarray:
    """Deterministic construction of the `pe` buffer, matching the PyTorch __init__."""
    position = jnp.arange(max_seq_length, dtype=jnp.float32)[:, None]            # (L, 1)
    div_term = jnp.exp(
        jnp.arange(0, d_model, 2, dtype=jnp.float32) * (-math.log(10000.0) / d_model)
    )                                                                             # (D/2,)
    angles = position * div_term                                                  # (L, D/2)
    pe = jnp.zeros((max_seq_length, d_model), dtype=jnp.float32)
    pe = pe.at[:, 0::2].set(jnp.sin(angles))
    pe = pe.at[:, 1::2].set(jnp.cos(angles))
    # unsqueeze(0).transpose(0, 1) -> (max_seq, 1, d_model)
    return pe[:, None, :].astype(dtype)


def _add_pe_kernel(x_ref, pe_ref, o_ref, *, batch: int):
    # x_ref/o_ref: (ts, B*D)  pe_ref: (ts, D).
    # Row-major flattening of (S, B, D) means each x row is B back-to-back
    # copies of the D feature lanes, so broadcasting pe over batch is a simple
    # lane-concat (jnp.tile) -- XLU work, not VALU, and tiny vs. the HBM DMA.
    pe_blk = pe_ref[...]
    pe_wide = jnp.tile(pe_blk, (1, batch)) if batch > 1 else pe_blk
    o_ref[...] = (x_ref[...] + pe_wide).astype(o_ref.dtype)


def _hw_budgets():
    """Generation-aware (per-step x payload target, scoped-VMEM cap)."""
    try:
        vmem_cap = int(pltpu.get_tpu_info().vmem_capacity_bytes)
    except Exception:
        vmem_cap = 128 << 20
    if vmem_cap <= (64 << 20):
        # v7x-class: 64 MiB VMEM per TC, ~3.2 TB/s HBM -> ~2x bigger tiles
        # needed to hide per-step overhead, but stay under the scoped default.
        return 4 << 20, 28 << 20
    # v5e / v6e: 128 MiB physical VMEM; a larger explicit scoped limit is safe.
    return 2 << 20, 48 << 20


def _choose_seq_tile(S: int, B: int, D: int, itemsize: int) -> int:
    """Pick the S-tile by per-step payload (bytes), VMEM budget, and megacore needs."""
    target_payload, vmem_cap = _hw_budgets()

    row_bytes = B * D * itemsize                               # one x (== out) row
    lane_row = (-(-(B * D) // 128) * 128) * itemsize           # lane-padded x/out row
    pe_row = (-(-D // 128) * 128) * itemsize                   # lane-padded pe row
    per_row_vmem = 2 * (2 * lane_row + pe_row)                 # double-buffered x+out+pe

    # Rows needed to hit the payload target, limited by the VMEM budget.
    ts = max(8, target_payload // row_bytes)
    ts = min(ts, max(8, (vmem_cap - (4 << 20)) // per_row_vmem))

    # Prefer >=4 grid steps (megacore sharding of S-tiles on v7x) as long as a
    # step keeps at least ~half the payload target; otherwise keep big tiles.
    min_rows = max(8, (target_payload // 2) // row_bytes)
    quarter = -(-S // 4)
    if quarter >= min_rows:
        ts = min(ts, quarter)
    else:
        ts = min(ts, max(-(-S // 2), min_rows))

    ts = min(ts, S)
    if ts < S:
        ts = max(8, (ts // 8) * 8)     # (8, 128) block-shape constraint
        ts = min(ts, S)
    return int(ts)


def _vmem_limit_bytes(ts: int, B: int, D: int, itemsize: int) -> int:
    _, vmem_cap = _hw_budgets()
    lane_row = (-(-(B * D) // 128) * 128) * itemsize
    pe_row = (-(-D // 128) * 128) * itemsize
    need = 2 * ts * (2 * lane_row + pe_row) + (2 << 20)        # dbl-buffered + headroom
    return int(max(16 << 20, min(need, vmem_cap)))


def positional_encoding_forward(x: jnp.ndarray, pe: jnp.ndarray, *,
                                seq_tile: int | None = None) -> jnp.ndarray:
    """Equivalent of PositionalEncoding.forward: x + pe[:x.shape[0]]."""
    S, B, D = x.shape
    assert pe.ndim == 3 and pe.shape[1] == 1 and pe.shape[2] == D, "bad pe shape"
    assert S <= pe.shape[0], "sequence length exceeds positional-encoding table"

    # Free layout changes: x is row-major contiguous so (S, B, D) -> (S, B*D)
    # is a view; pe just drops its size-1 batch dim.  Dense 2D blocks avoid
    # the 2->8 / 1->8 sublane padding a 3D block suffers at small batch.
    x2 = x.reshape(S, B * D)
    pe2 = pe.reshape(pe.shape[0], D).astype(x.dtype)
    # NOTE: casting pe to x.dtype is exact for f32 x (the demo / PyTorch default);
    # for bf16 x PyTorch would upcast the add -- acceptable, test with looser tol.

    itemsize = jnp.dtype(x.dtype).itemsize
    ts = seq_tile if seq_tile is not None else _choose_seq_tile(S, B, D, itemsize)
    ts = int(max(1, min(ts, S)))
    if ts < S:
        ts = max(8, (ts // 8) * 8)     # keep the (8, 128) constraint for partial tiles
        ts = min(ts, S)
    grid = (pl.cdiv(S, ts),)

    kernel = functools.partial(_add_pe_kernel, batch=B)
    out2 = pl.pallas_call(
        kernel,
        out_shape=jax.ShapeDtypeStruct((S, B * D), x.dtype),
        grid_spec=pl.GridSpec(
            grid=grid,
            in_specs=[
                # x: dense (ts, B*D) window, lane axis a multiple of 128 when D is.
                pl.BlockSpec((ts, B * D), lambda i: (i, 0)),
                # pe: same sequence window straight out of the full (max_seq, D)
                # table -- no wrapper slice, no extra HBM copy of pe.
                pl.BlockSpec((ts, D), lambda i: (i, 0)),
            ],
            out_specs=pl.BlockSpec((ts, B * D), lambda i: (i, 0)),
        ),
        compiler_params=pltpu.CompilerParams(
            dimension_semantics=("parallel",),   # S-tiles are independent (megacore)
            vmem_limit_bytes=_vmem_limit_bytes(ts, B, D, itemsize),
        ),
    )(x2, pe2)
    return out2.reshape(S, B, D)


if __name__ == "__main__":
    d_model = 128          # lane-dense last axis (multiple of 128)
    seq_len = 256
    batch = 2
    max_seq_length = 512   # smaller-than-default table; semantics identical

    key = jax.random.PRNGKey(0)
    x = jax.random.normal(key, (seq_len, batch, d_model), dtype=jnp.float32)
    pe = make_positional_encoding(d_model, max_seq_length)

    # Pure-JAX reference of the PyTorch forward.
    ref = x + pe[:seq_len]

    # 1) Auto-chosen tile: payload-targeted, generation-aware (single dense
    #    block at this demo size, multi-MiB tiles at real sizes).
    out = jax.block_until_ready(positional_encoding_forward(x, pe))
    assert out.shape == x.shape and out.dtype == x.dtype
    assert jnp.allclose(out, ref, atol=1e-6), "mismatch vs reference (auto tile)"

    # 2) Explicit small tile: exercises the multi-step pipelined grid path.
    out_tiled = jax.block_until_ready(positional_encoding_forward(x, pe, seq_tile=64))
    assert jnp.allclose(out_tiled, ref, atol=1e-6), "mismatch vs reference (tiled)"

    print("KERNEL_OK")
</pallas_src>

<mosaic_0001>
module attributes {stable_mosaic.version = 11 : i64} {
  func.func @_add_pe_kernel(%arg0: i32, %arg1: memref<256x256xf32, #tpu.memory_space<vmem>>, %arg2: memref<256x128xf32, #tpu.memory_space<vmem>>, %arg3: memref<256x256xf32, #tpu.memory_space<vmem>>) attributes {dimension_semantics = [#tpu.dimension_semantics<parallel>], iteration_bounds = array<i64: 1>, scalar_prefetch = 0 : i64, scratch_operands = 0 : i64, tpu.core_type = #tpu.core_type<tc>, window_params = [{transform_indices = @transform_0, window_bounds = array<i64: 256, 256>}, {transform_indices = @transform_1, window_bounds = array<i64: 256, 128>}, {transform_indices = @transform_2, window_bounds = array<i64: 256, 256>}]} {
    %c0 = arith.constant 0 : index
    %c0_0 = arith.constant 0 : index
    %0 = vector.load %arg2[%c0, %c0_0] : memref<256x128xf32, #tpu.memory_space<vmem>>, vector<256x128xf32>
    %1 = tpu.concatenate %0, %0 in 1 : vector<256x128xf32>, vector<256x128xf32> -> vector<256x256xf32>
    %c0_1 = arith.constant 0 : index
    %c0_2 = arith.constant 0 : index
    %2 = vector.load %arg1[%c0_1, %c0_2] : memref<256x256xf32, #tpu.memory_space<vmem>>, vector<256x256xf32>
    %3 = arith.addf %2, %1 : vector<256x256xf32>
    %c0_3 = arith.constant 0 : index
    %c0_4 = arith.constant 0 : index
    %4 = vector.load %arg3[%c0_3, %c0_4] : memref<256x256xf32, #tpu.memory_space<vmem>>, vector<256x256xf32>
    tpu.vector_store %arg3[%c0_3, %c0_4], %3 {strides = array<i32>} : memref<256x256xf32, #tpu.memory_space<vmem>>, vector<256x256xf32>,
    return
  }
  func.func @transform_0(%arg0: i32) -> (i32, i32) {
    %c0_i32 = arith.constant 0 : i32
    %c0_i32_0 = arith.constant 0 : i32
    return %arg0, %c0_i32 : i32, i32
  }
  func.func @transform_1(%arg0: i32) -> (i32, i32) {
    %c0_i32 = arith.constant 0 : i32
    %c0_i32_0 = arith.constant 0 : i32
    return %arg0, %c0_i32 : i32, i32
  }
  func.func @transform_2(%arg0: i32) -> (i32, i32) {
    %c0_i32 = arith.constant 0 : i32
    %c0_i32_0 = arith.constant 0 : i32
    return %arg0, %c0_i32 : i32, i32
  }
}

</mosaic_0001>

<llo_original>
// kernel: tpu_custom_call.1
$region0: #{tpu_custom_call.1}
  #allocation0 [shape = 'u32[]', space=smem, size = 0x4, offset = 0x4, fixed_abs, tag = 'smem constant byte address 0x4 - core index']
  #allocation1 [shape = 'u32[144,128]{1,0:T(1,128)}', space=vmem, size = 0x12000, scoped, tag = 'internal scratch']
  %s0 = inlined_call_operand.hbm [shape: f32[256,256], index: 0, kind: input, shape index: {}]
  %s1 = inlined_call_operand.hbm [shape: f32[512,128], index: 1, kind: input, shape index: {}]
  %s2 = inlined_call_operand.hbm [shape: f32[256,256], index: 2, kind: output, shape index: {}]
  %s3 = sld [smem:[#allocation0]]
  $region26: #{tpu_custom_call.1} parent=0
    _
  %s5 = ssub.s32 1, %s3
  %s6 = scalar_select 0, %s5, %s3
  $region1: #{tpu_custom_call.1} parent=0
    #allocation2 [shape = 'u8[262144]{0}', space=vmem, size = 0x40000, scoped, tag = 'input window, operand 0, single buffered']
    #allocation3 [shape = 's32[1]{0}', space=sflag, size = 0x4, scoped, tag = 'scoped memory for tpu_custom_call.1']
    #allocation4 [shape = 's32[1]{0}', space=sflag, size = 0x4, scoped, tag = 'scoped memory for tpu_custom_call.1']
    #allocation5 [shape = 'u8[131072]{0}', space=vmem, size = 0x20000, scoped, tag = 'input window, operand 1, single buffered']
    #allocation6 [shape = 's32[1]{0}', space=sflag, size = 0x4, scoped, tag = 'scoped memory for tpu_custom_call.1']
    #allocation7 [shape = 'u8[262144]{0}', space=vmem, size = 0x40000, scoped, tag = 'output window, operand 0, single buffered']
    %7 = vsyncpa [#allocation3], 0
    %8 = vsyncpa [#allocation6], 0
    %9 = vsyncpa [#allocation4], 0
    // Predicated region
    $region2: #{tpu_custom_call.1} parent=1 // pred_check
      _
    $region3: #{tpu_custom_call.1} parent=1 // pred_check_branch
      %11 = sbr.rel (0) target = $region5
    $region4: #{tpu_custom_call.1} parent=1 // pred_region
      %s13 = ssub.s32 8192, 8192
      %14 = vsyncadd [#allocation3], %s13
      %s15 = sshll.u32 [#allocation2], 4
      %s16 = int_to_ptr.vmem [resolvable:$true] %s15
      %21 = dma.hbm_to_vmem [thread:$0]  %s0, 8192, %s16, [#allocation3], 256, 256, 16
    $region5: #{tpu_custom_call.1} parent=1 // pred_fallthru
      _
    // Predicated region
    $region6: #{tpu_custom_call.1} parent=1 // pred_check
      _
    $region7: #{tpu_custom_call.1} parent=1 // pred_check_branch
      %23 = sbr.rel (0) target = $region9
    $region8: #{tpu_custom_call.1} parent=1 // pred_region
      %s25 = ssub.s32 4096, 4096
      %26 = vsyncadd [#allocation6], %s25
      %s27 = sshll.u32 [#allocation5], 4
      %s28 = int_to_ptr.vmem [resolvable:$true] %s27
      %33 = dma.hbm_to_vmem [thread:$0]  %s1, 4096, %s28, [#allocation6], 128, 128, 8
    $region9: #{tpu_custom_call.1} parent=1 // pred_fallthru
      _
    // Predicated region
    $region10: #{tpu_custom_call.1} parent=1 // pred_check
      _
    $region11: #{tpu_custom_call.1} parent=1 // pred_check_branch
      %35 = sbr.rel (0) target = $region13
    $region12: #{tpu_custom_call.1} parent=1 // pred_region
      %36 = dma.done [#allocation3], 8192
    $region13: #{tpu_custom_call.1} parent=1 // pred_fallthru
      _
    // Predicated region
    $region14: #{tpu_custom_call.1} parent=1 // pred_check
      _
    $region15: #{tpu_custom_call.1} parent=1 // pred_check_branch
      %38 = sbr.rel (0) target = $region17
    $region16: #{tpu_custom_call.1} parent=1 // pred_region
      %39 = dma.done [#allocation6], 4096
    $region17: #{tpu_custom_call.1} parent=1 // pred_fallthru
      _
    %v40 = vld [vmem:[#allocation5] sm:$0xff]
    %v41 = vld [vmem:[#allocation5 + $0x8] sm:$0xff]
    %v42 = vld [vmem:[#allocation5 + $0x10] sm:$0xff]
    %v43 = vld [vmem:[#allocation5 + $0x18] sm:$0xff]
    %v44 = vld [vmem:[#allocation5 + $0x20] sm:$0xff]
    %v45 = vld [vmem:[#allocation5 + $0x28] sm:$0xff]
    %v46 = vld [vmem:[#allocation5 + $0x30] sm:$0xff]
    %v47 = vld [vmem:[#allocation5 + $0x38] sm:$0xff]
    %v48 = vld [vmem:[#allocation5 + $0x40] sm:$0xff]
    %v49 = vld [vmem:[#allocation5 + $0x48] sm:$0xff]
    %v50 = vld [vmem:[#allocation5 + $0x50] sm:$0xff]
    %v51 = vld [vmem:[#allocation5 + $0x58] sm:$0xff]
    %v52 = vld [vmem:[#allocation5 + $0x60] sm:$0xff]
    %v53 = vld [vmem:[#allocation5 + $0x68] sm:$0xff]
    %v54 = vld [vmem:[#allocation5 + $0x70] sm:$0xff]
    %v55 = vld [vmem:[#allocation5 + $0x78] sm:$0xff]
    %v56 = vld [vmem:[#allocation5 + $0x80] sm:$0xff]
    %v57 = vld [vmem:[#allocation5 + $0x88] sm:$0xff]
    %v58 = vld [vmem:[#allocation5 + $0x90] sm:$0xff]
    %v59 = vld [vmem:[#allocation5 + $0x98] sm:$0xff]
    %v60 = vld [vmem:[#allocation5 + $0xa0] sm:$0xff]
    %v61 = vld [vmem:[#allocation5 + $0xa8] sm:$0xff]
    %v62 = vld [vmem:[#allocation5 + $0xb0] sm:$0xff]
    %v63 = vld [vmem:[#allocation5 + $0xb8] sm:$0xff]
    %v64 = vld [vmem:[#allocation5 + $0xc0] sm:$0xff]
    %v65 = vld [vmem:[#allocation5 + $0xc8] sm:$0xff]
    %v66 = vld [vmem:[#allocation5 + $0xd0] sm:$0xff]
    %v67 = vld [vmem:[#allocation5 + $0xd8] sm:$0xff]
    %v68 = vld [vmem:[#allocation5 + $0xe0] sm:$0xff]
    %v69 = vld [vmem:[#allocation5 + $0xe8] sm:$0xff]
    %v70 = vld [vmem:[#allocation5 + $0xf0] sm:$0xff]
    %v71 = vld [vmem:[#allocation5 + $0xf8] sm:$0xff]
    %v72 = vld [vmem:[#allocation2] sm:$0xff]
    %v73 = vld [vmem:[#allocation2 + $0x8] sm:$0xff]
    %v74 = vld [vmem:[#allocation2 + $0x10] sm:$0xff]
    %v75 = vld [vmem:[#allocation2 + $0x18] sm:$0xff]
    %v76 = vld [vmem:[#allocation2 + $0x20] sm:$0xff]
    %v77 = vld [vmem:[#allocation2 + $0x28] sm:$0xff]
    %v78 = vld [vmem:[#allocation2 + $0x30] sm:$0xff]
    %v79 = vld [vmem:[#allocation2 + $0x38] sm:$0xff]
    %v80 = vld [vmem:[#allocation2 + $0x40] sm:$0xff]
    %v81 = vld [vmem:[#allocation2 + $0x48] sm:$0xff]
    %v82 = vld [vmem:[#allocation2 + $0x50] sm:$0xff]
    %v83 = vld [vmem:[#allocation2 + $0x58] sm:$0xff]
    %v84 = vld [vmem:[#allocation2 + $0x60] sm:$0xff]
    %v85 = vld [vmem:[#allocation2 + $0x68] sm:$0xff]
    %v86 = vld [vmem:[#allocation2 + $0x70] sm:$0xff]
    %v87 = vld [vmem:[#allocation2 + $0x78] sm:$0xff]
    %v88 = vld [vmem:[#allocation2 + $0x80] sm:$0xff]
    %v89 = vld [vmem:[#allocation2 + $0x88] sm:$0xff]
    %v90 = vld [vmem:[#allocation2 + $0x90] sm:$0xff]
    %v91 = vld [vmem:[#allocation2 + $0x98] sm:$0xff]
    %v92 = vld [vmem:[#allocation2 + $0xa0] sm:$0xff]
    %v93 = vld [vmem:[#allocation2 + $0xa8] sm:$0xff]
    %v94 = vld [vmem:[#allocation2 + $0xb0] sm:$0xff]
    %v95 = vld [vmem:[#allocation2 + $0xb8] sm:$0xff]
    %v96 = vld [vmem:[#allocation2 + $0xc0] sm:$0xff]
    %v97 = vld [vmem:[#allocation2 + $0xc8] sm:$0xff]
    %v98 = vld [vmem:[#allocation2 + $0xd0] sm:$0xff]
    %v99 = vld [vmem:[#allocation2 + $0xd8] sm:$0xff]
    %v100 = vld [vmem:[#allocation2 + $0xe0] sm:$0xff]
    %v101 = vld [vmem:[#allocation2 + $0xe8] sm:$0xff]
    %v102 = vld [vmem:[#allocation2 + $0xf0] sm:$0xff]
    %v103 = vld [vmem:[#allocation2 + $0xf8] sm:$0xff]
    %v104 = vld [vmem:[#allocation2 + $0x100] sm:$0xff]
    %v105 = vld [vmem:[#allocation2 + $0x108] sm:$0xff]
    %v106 = vld [vmem:[#allocation2 + $0x110] sm:$0xff]
    %v107 = vld [vmem:[#allocation2 + $0x118] sm:$0xff]
    %v108 = vld [vmem:[#allocation2 + $0x120] sm:$0xff]
    %v109 = vld [vmem:[#allocation2 + $0x128] sm:$0xff]
    %v110 = vld [vmem:[#allocation2 + $0x130] sm:$0xff]
    %v111 = vld [vmem:[#allocation2 + $0x138] sm:$0xff]
    %v112 = vld [vmem:[#allocation2 + $0x140] sm:$0xff]
    %v113 = vld [vmem:[#allocation2 + $0x148] sm:$0xff]
    %v114 = vld [vmem:[#allocation2 + $0x150] sm:$0xff]
    %v115 = vld [vmem:[#allocation2 + $0x158] sm:$0xff]
    %v116 = vld [vmem:[#allocation2 + $0x160] sm:$0xff]
    %v117 = vld [vmem:[#allocation2 + $0x168] sm:$0xff]
    %v118 = vld [vmem:[#allocation2 + $0x170] sm:$0xff]
    %v119 = vld [vmem:[#allocation2 + $0x178] sm:$0xff]
    %v120 = vld [vmem:[#allocation2 + $0x180] sm:$0xff]
    %v121 = vld [vmem:[#allocation2 + $0x188] sm:$0xff]
    %v122 = vld [vmem:[#allocation2 + $0x190] sm:$0xff]
    %v123 = vld [vmem:[#allocation2 + $0x198] sm:$0xff]
    %v124 = vld [vmem:[#allocation2 + $0x1a0] sm:$0xff]
    %v125 = vld [vmem:[#allocation2 + $0x1a8] sm:$0xff]
    %v126 = vld [vmem:[#allocation2 + $0x1b0] sm:$0xff]
    %v127 = vld [vmem:[#allocation2 + $0x1b8] sm:$0xff]
    %v128 = vld [vmem:[#allocation2 + $0x1c0] sm:$0xff]
    %v129 = vld [vmem:[#allocation2 + $0x1c8] sm:$0xff]
    %v130 = vld [vmem:[#allocation2 + $0x1d0] sm:$0xff]
    %v131 = vld [vmem:[#allocation2 + $0x1d8] sm:$0xff]
    %v132 = vld [vmem:[#allocation2 + $0x1e0] sm:$0xff]
    %v133 = vld [vmem:[#allocation2 + $0x1e8] sm:$0xff]
    %v134 = vld [vmem:[#allocation2 + $0x1f0] sm:$0xff]
    %v135 = vld [vmem:[#allocation2 + $0x1f8] sm:$0xff]
    %v136 = vadd.f32 %v72, %v40
    %v137 = vadd.f32 %v73, %v40
    %v138 = vadd.f32 %v74, %v41
    %v139 = vadd.f32 %v75, %v41
    %v140 = vadd.f32 %v76, %v42
    %v141 = vadd.f32 %v77, %v42
    %v142 = vadd.f32 %v78, %v43
    %v143 = vadd.f32 %v79, %v43
    %v144 = vadd.f32 %v80, %v44
    %v145 = vadd.f32 %v81, %v44
    %v146 = vadd.f32 %v82, %v45
    %v147 = vadd.f32 %v83, %v45
    %v148 = vadd.f32 %v84, %v46
    %v149 = vadd.f32 %v85, %v46
    %v150 = vadd.f32 %v86, %v47
    %v151 = vadd.f32 %v87, %v47
    %v152 = vadd.f32 %v88, %v48
    %v153 = vadd.f32 %v89, %v48
    %v154 = vadd.f32 %v90, %v49
    %v155 = vadd.f32 %v91, %v49
    %v156 = vadd.f32 %v92, %v50
    %v157 = vadd.f32 %v93, %v50
    %v158 = vadd.f32 %v94, %v51
    %v159 = vadd.f32 %v95, %v51
    %v160 = vadd.f32 %v96, %v52
    %v161 = vadd.f32 %v97, %v52
    %v162 = vadd.f32 %v98, %v53
    %v163 = vadd.f32 %v99, %v53
    %v164 = vadd.f32 %v100, %v54
    %v165 = vadd.f32 %v101, %v54
    %v166 = vadd.f32 %v102, %v55
    %v167 = vadd.f32 %v103, %v55
    %v168 = vadd.f32 %v104, %v56
    %v169 = vadd.f32 %v105, %v56
    %v170 = vadd.f32 %v106, %v57
    %v171 = vadd.f32 %v107, %v57
    %v172 = vadd.f32 %v108, %v58
    %v173 = vadd.f32 %v109, %v58
    %v174 = vadd.f32 %v110, %v59
    %v175 = vadd.f32 %v111, %v59
    %v176 = vadd.f32 %v112, %v60
    %v177 = vadd.f32 %v113, %v60
    %v178 = vadd.f32 %v114, %v61
    %v179 = vadd.f32 %v115, %v61
    %v180 = vadd.f32 %v116, %v62
    %v181 = vadd.f32 %v117, %v62
    %v182 = vadd.f32 %v118, %v63
    %v183 = vadd.f32 %v119, %v63
    %v184 = vadd.f32 %v120, %v64
    %v185 = vadd.f32 %v121, %v64
    %v186 = vadd.f32 %v122, %v65
    %v187 = vadd.f32 %v123, %v65
    %v188 = vadd.f32 %v124, %v66
    %v189 = vadd.f32 %v125, %v66
    %v190 = vadd.f32 %v126, %v67
    %v191 = vadd.f32 %v127, %v67
    %v192 = vadd.f32 %v128, %v68
    %v193 = vadd.f32 %v129, %v68
    %v194 = vadd.f32 %v130, %v69
    %v195 = vadd.f32 %v131, %v69
    %v196 = vadd.f32 %v132, %v70
    %v197 = vadd.f32 %v133, %v70
    %v198 = vadd.f32 %v134, %v71
    %v199 = vadd.f32 %v135, %v71
    %200 = vst [vmem:[#allocation7] sm:$0xff] %v136
    %201 = vst [vmem:[#allocation7 + $0x8] sm:$0xff] %v137
    %202 = vst [vmem:[#allocation7 + $0x10] sm:$0xff] %v138
    %203 = vst [vmem:[#allocation7 + $0x18] sm:$0xff] %v139
    %204 = vst [vmem:[#allocation7 + $0x20] sm:$0xff] %v140
    %205 = vst [vmem:[#allocation7 + $0x28] sm:$0xff] %v141
    %206 = vst [vmem:[#allocation7 + $0x30] sm:$0xff] %v142
    %207 = vst [vmem:[#allocation7 + $0x38] sm:$0xff] %v143
    %208 = vst [vmem:[#allocation7 + $0x40] sm:$0xff] %v144
    %209 = vst [vmem:[#allocation7 + $0x48] sm:$0xff] %v145
    %210 = vst [vmem:[#allocation7 + $0x50] sm:$0xff] %v146
    %211 = vst [vmem:[#allocation7 + $0x58] sm:$0xff] %v147
    %212 = vst [vmem:[#allocation7 + $0x60] sm:$0xff] %v148
    %213 = vst [vmem:[#allocation7 + $0x68] sm:$0xff] %v149
    %214 = vst [vmem:[#allocation7 + $0x70] sm:$0xff] %v150
    %215 = vst [vmem:[#allocation7 + $0x78] sm:$0xff] %v151
    %216 = vst [vmem:[#allocation7 + $0x80] sm:$0xff] %v152
    %217 = vst [vmem:[#allocation7 + $0x88] sm:$0xff] %v153
    %218 = vst [vmem:[#allocation7 + $0x90] sm:$0xff] %v154
    %219 = vst [vmem:[#allocation7 + $0x98] sm:$0xff] %v155
    %220 = vst [vmem:[#allocation7 + $0xa0] sm:$0xff] %v156
    %221 = vst [vmem:[#allocation7 + $0xa8] sm:$0xff] %v157
    %222 = vst [vmem:[#allocation7 + $0xb0] sm:$0xff] %v158
    %223 = vst [vmem:[#allocation7 + $0xb8] sm:$0xff] %v159
    %224 = vst [vmem:[#allocation7 + $0xc0] sm:$0xff] %v160
    %225 = vst [vmem:[#allocation7 + $0xc8] sm:$0xff] %v161
    %226 = vst [vmem:[#allocation7 + $0xd0] sm:$0xff] %v162
    %227 = vst [vmem:[#allocation7 + $0xd8] sm:$0xff] %v163
    %228 = vst [vmem:[#allocation7 + $0xe0] sm:$0xff] %v164
    %229 = vst [vmem:[#allocation7 + $0xe8] sm:$0xff] %v165
    %230 = vst [vmem:[#allocation7 + $0xf0] sm:$0xff] %v166
    %231 = vst [vmem:[#allocation7 + $0xf8] sm:$0xff] %v167
    %232 = vst [vmem:[#allocation7 + $0x100] sm:$0xff] %v168
    %233 = vst [vmem:[#allocation7 + $0x108] sm:$0xff] %v169
    %234 = vst [vmem:[#allocation7 + $0x110] sm:$0xff] %v170
    %235 = vst [vmem:[#allocation7 + $0x118] sm:$0xff] %v171
    %236 = vst [vmem:[#allocation7 + $0x120] sm:$0xff] %v172
    %237 = vst [vmem:[#allocation7 + $0x128] sm:$0xff] %v173
    %238 = vst [vmem:[#allocation7 + $0x130] sm:$0xff] %v174
    %239 = vst [vmem:[#allocation7 + $0x138] sm:$0xff] %v175
    %240 = vst [vmem:[#allocation7 + $0x140] sm:$0xff] %v176
    %241 = vst [vmem:[#allocation7 + $0x148] sm:$0xff] %v177
    %242 = vst [vmem:[#allocation7 + $0x150] sm:$0xff] %v178
    %243 = vst [vmem:[#allocation7 + $0x158] sm:$0xff] %v179
    %244 = vst [vmem:[#allocation7 + $0x160] sm:$0xff] %v180
    %245 = vst [vmem:[#allocation7 + $0x168] sm:$0xff] %v181
    %246 = vst [vmem:[#allocation7 + $0x170] sm:$0xff] %v182
    %247 = vst [vmem:[#allocation7 + $0x178] sm:$0xff] %v183
    %248 = vst [vmem:[#allocation7 + $0x180] sm:$0xff] %v184
    %249 = vst [vmem:[#allocation7 + $0x188] sm:$0xff] %v185
    %250 = vst [vmem:[#allocation7 + $0x190] sm:$0xff] %v186
    %251 = vst [vmem:[#allocation7 + $0x198] sm:$0xff] %v187
    %252 = vst [vmem:[#allocation7 + $0x1a0] sm:$0xff] %v188
    %253 = vst [vmem:[#allocation7 + $0x1a8] sm:$0xff] %v189
    %254 = vst [vmem:[#allocation7 + $0x1b0] sm:$0xff] %v190
    %255 = vst [vmem:[#allocation7 + $0x1b8] sm:$0xff] %v191
    %256 = vst [vmem:[#allocation7 + $0x1c0] sm:$0xff] %v192
    %257 = vst [vmem:[#allocation7 + $0x1c8] sm:$0xff] %v193
    %258 = vst [vmem:[#allocation7 + $0x1d0] sm:$0xff] %v194
    %259 = vst [vmem:[#allocation7 + $0x1d8] sm:$0xff] %v195
    %260 = vst [vmem:[#allocation7 + $0x1e0] sm:$0xff] %v196
    %261 = vst [vmem:[#allocation7 + $0x1e8] sm:$0xff] %v197
    %262 = vst [vmem:[#allocation7 + $0x1f0] sm:$0xff] %v198
    %263 = vst [vmem:[#allocation7 + $0x1f8] sm:$0xff] %v199
    // Predicated region
    $region18: #{tpu_custom_call.1} parent=1 // pred_check
      _
    $region19: #{tpu_custom_call.1} parent=1 // pred_check_branch
      %265 = sbr.rel (0) target = $region21
    $region20: #{tpu_custom_call.1} parent=1 // pred_region
      %s267 = ssub.s32 8192, 8192
      %268 = vsyncadd [#allocation4], %s267
      %s269 = sshll.u32 [#allocation7], 4
      %s270 = int_to_ptr.vmem [resolvable:$true] %s269
      %275 = dma.vmem_to_hbm [thread:$0]  %s270, 8192, %s2, [#allocation4], 256, 256, 16
    $region21: #{tpu_custom_call.1} parent=1 // pred_fallthru
      _
    // Predicated region
    $region22: #{tpu_custom_call.1} parent=1 // pred_check
      _
    $region23: #{tpu_custom_call.1} parent=1 // pred_check_branch
      %277 = sbr.rel (0) target = $region25
    $region24: #{tpu_custom_call.1} parent=1 // pred_region
      %278 = dma.done [#allocation4], 8192
    $region25: #{tpu_custom_call.1} parent=1 // pred_fallthru
      _
    %279 = vsyncpa [#allocation3], 1
    %280 = vsyncpa [#allocation6], 1
    %281 = vsyncpa [#allocation4], 1

</llo_original>
